<compile_context>
chip_gen: v7x
topology: tpu7x:2x2x1
jax: 0.10.0
libtpu: 0.0.40
codegen_flags: <defaults>
</compile_context>

<pallas_src>
import functools

import jax
import jax.numpy as jnp
from jax import lax
from jax.experimental import pallas as pl
from jax.experimental.pallas import tpu as pltpu


# ------------------------------ Pallas kernel -------------------------------

def _fused_recurrence_kernel(x_ref, h0_ref,
                             wpre_ref, bpre_ref,
                             wx_ref, bcell_ref, wh_ref,
                             wpost_ref, bpost_ref,
                             out_ref, hout_ref,
                             *, residual, num_timesteps, compute_dtype):
    """One grid step = one row block; the whole T recurrence runs in-kernel.

    Layout: channels on sublanes, M = N*H*W on lanes (lane-dense).
      x_ref     : (C_harbor, TM)  compute_dtype   (constant across timesteps)
      h0_ref    : (hid, TM)       f32             (initial state)
      wpre_ref  : (hid, C_harbor) compute_dtype
      wx_ref    : (hid, hid)      compute_dtype
      wh_ref    : (hid, hid)      compute_dtype
      wpost_ref : (C_out, hid)    compute_dtype
      biases    : (C, 1)          f32
      out_ref   : (C_out, TM)     f32
      hout_ref  : (hid, TM)       f32
    """
    x = x_ref[...]                                              # (Ch, TM)

    # ---- timestep-invariant work, hoisted out of the recurrence ------------
    # pre_memory:   pre = ReLU(Wpre^T @ x + b_pre)       (same every timestep)
    # cell x-half:  zx  = Wx^T @ pre + b_cell             (same every timestep)
    pre = jnp.dot(wpre_ref[...], x, preferred_element_type=jnp.float32)
    pre = jnp.maximum(pre + bpre_ref[...], 0.0)                 # (hid, TM) f32
    zx = jnp.dot(wx_ref[...], pre.astype(compute_dtype),
                 preferred_element_type=jnp.float32) + bcell_ref[...]

    wh = wh_ref[...]                                            # (hid, hid)

    # ---- per-timestep recurrence: h' = tanh(zx + Wh^T @ h) ------------------
    def step(_, h):
        zh = jnp.dot(wh, h.astype(compute_dtype),
                     preferred_element_type=jnp.float32)
        return jnp.tanh(zx + zh)

    h0 = h0_ref[...]                                            # (hid, TM) f32
    if num_timesteps == 1:
        h_final = step(0, h0)
    else:
        h_final = lax.fori_loop(0, num_timesteps, step, h0,
                                unroll=(num_timesteps <= 8))

    # ---- post_memory (+ residual), written once per row block --------------
    y = jnp.dot(wpost_ref[...], h_final.astype(compute_dtype),
                preferred_element_type=jnp.float32) + bpost_ref[...]
    if residual:
        y = y + x.astype(jnp.float32)
    out_ref[...] = jnp.maximum(y, 0.0)
    hout_ref[...] = h_final


# ------------------------------ layout helpers ------------------------------

def _nchw_to_cm(x):
    # (N, C, H, W) -> (C, N*H*W)   (channels on sublanes, spatial on lanes)
    n, c, h, w = x.shape
    return jnp.transpose(x, (1, 0, 2, 3)).reshape(c, n * h * w)


def _cm_to_nchw(x_cm, n, h, w):
    c = x_cm.shape[0]
    return jnp.transpose(x_cm.reshape(c, n, h, w), (1, 0, 2, 3))


# ------------------------------ module wrapper -------------------------------

class RecurrentModuleTPU:
    """JAX/Pallas re-implementation of pt_tnn RecurrentModule.forward."""

    def __init__(self, in_channels_per_input, num_inputs, hidden_channels,
                 spatial, residual=True, seed=0, compute_dtype=jnp.float32):
        # compute_dtype=jnp.bfloat16 halves weight/activation DMA on v6e/v7x
        # (fp32 MXU accumulation either way); fp32 is best on v5e / small dims.
        self.residual = residual
        self.spatial = spatial
        self.num_inputs = num_inputs
        self.harbor_channels = in_channels_per_input * num_inputs
        self.hidden_channels = hidden_channels
        # residual add requires post output channels == harbor channels
        self.out_channels = self.harbor_channels if residual else hidden_channels
        self.input_shapes = [(in_channels_per_input, spatial, spatial)] * num_inputs
        self.compute_dtype = jnp.dtype(compute_dtype)

        pack = 16 if self.compute_dtype == jnp.dtype(jnp.bfloat16) else 8
        assert hidden_channels % pack == 0, (
            f"hidden_channels must be a multiple of {pack} for this layout")

        # Generation-aware VMEM capacity (v7x: 64 MiB/TC, v5e/v6e: 128 MiB).
        try:
            info = pltpu.get_tpu_info()
            cap = int(getattr(info, "vmem_capacity_bytes", 0))
            self._vmem_capacity = cap if cap > 0 else (128 << 20)
        except Exception:
            self._vmem_capacity = 128 << 20

        key = jax.random.PRNGKey(seed)
        k = jax.random.split(key, 7)
        s = 0.1
        ch, hh, co = self.harbor_channels, hidden_channels, self.out_channels
        cd = self.compute_dtype
        # All weights stored TRANSPOSED for the (C, M) layout: y^T = W^T @ x^T.
        # pre_memory: 1x1 conv (Cin=harbor, Cout=hidden)
        self.w_pre_t = (s * jax.random.normal(k[0], (hh, ch), jnp.float32)).astype(cd)
        self.b_pre = 0.05 * jax.random.normal(k[1], (hh, 1), jnp.float32)
        # recurrent cell (separate Wx / Wh; no fused-weight staging buffer)
        self.w_x_t = (s * jax.random.normal(k[2], (hh, hh), jnp.float32)).astype(cd)
        self.w_h_t = (s * jax.random.normal(k[3], (hh, hh), jnp.float32)).astype(cd)
        self.b_cell = 0.05 * jax.random.normal(k[4], (hh, 1), jnp.float32)
        # post_memory: 1x1 conv (Cin=hidden, Cout=out)
        self.w_post_t = (s * jax.random.normal(k[5], (co, hh), jnp.float32)).astype(cd)
        self.b_post = 0.05 * jax.random.normal(k[6], (co, 1), jnp.float32)

    # ------------------------------------------------------------------ utils
    def _check_input_shapes(self, inputs):
        curr = [tuple(i.shape[1:]) for i in inputs]
        assert set(curr) == set(self.input_shapes), (curr, self.input_shapes)

    def zero_state(self, batch):
        return jnp.zeros(
            (batch, self.hidden_channels, self.spatial, self.spatial), jnp.float32)

    def _vmem_estimate(self, tm):
        cd = self.compute_dtype.itemsize
        ch, hid, co = self.harbor_channels, self.hidden_channels, self.out_channels
        # double-buffered pipelined input/output blocks
        blocks = 2 * (ch * tm * cd + hid * tm * 4 + co * tm * 4 + hid * tm * 4)
        # weights + biases (constant index maps; budget double-buffered copies)
        weights = 2 * ((hid * ch + 2 * hid * hid + co * hid) * cd
                       + (2 * hid + co) * 4)
        # in-kernel live values: pre, zx, h carry, casts, y + headroom
        live = (3 * hid + co) * tm * 4 + (hid + ch) * tm * cd
        return blocks + weights + live + (2 << 20)

    def _pick_row_tile(self, m_pad):
        # v7x: keep >= 2 row blocks so the "parallel" axis spans both
        # TensorCores; costs a single extra grid step on v5e/v6e (1 TC).
        cap = m_pad if m_pad < 256 else max(128, ((m_pad // 2) // 128) * 128)
        cap = min(cap, 8192)
        budget = int(0.6 * self._vmem_capacity)
        tm = max(128, cap - cap % 128)
        while tm > 128 and (m_pad % tm or self._vmem_estimate(tm) > budget):
            tm -= 128
        return tm  # m_pad is a multiple of 128, so tm == 128 always divides

    # ------------------------------------------------------------- fused call
    def _pallas_recurrence(self, x_cm, h_cm, num_timesteps):
        ch, m = x_cm.shape
        hid, co = self.hidden_channels, self.out_channels
        tm = self._pick_row_tile(m)
        n_rb = m // tm

        vmem_limit = int(min(max(self._vmem_estimate(tm), 16 << 20),
                             int(0.9 * self._vmem_capacity)))

        kernel = functools.partial(
            _fused_recurrence_kernel,
            residual=self.residual,
            num_timesteps=int(num_timesteps),
            compute_dtype=self.compute_dtype)

        out_cm, h_out_cm = pl.pallas_call(
            kernel,
            out_shape=(jax.ShapeDtypeStruct((co, m), jnp.float32),
                       jax.ShapeDtypeStruct((hid, m), jnp.float32)),
            grid=(n_rb,),
            in_specs=[
                pl.BlockSpec((ch, tm), lambda i: (0, i)),          # harbor
                pl.BlockSpec((hid, tm), lambda i: (0, i)),         # h0
                pl.BlockSpec((hid, ch), lambda i: (0, 0)),         # Wpre^T
                pl.BlockSpec((hid, 1), lambda i: (0, 0)),          # b_pre
                pl.BlockSpec((hid, hid), lambda i: (0, 0)),        # Wx^T
                pl.BlockSpec((hid, 1), lambda i: (0, 0)),          # b_cell
                pl.BlockSpec((hid, hid), lambda i: (0, 0)),        # Wh^T
                pl.BlockSpec((co, hid), lambda i: (0, 0)),         # Wpost^T
                pl.BlockSpec((co, 1), lambda i: (0, 0)),           # b_post
            ],
            out_specs=(
                pl.BlockSpec((co, tm), lambda i: (0, i)),          # output
                pl.BlockSpec((hid, tm), lambda i: (0, i)),         # new state
            ),
            input_output_aliases={1: 1},   # reuse the h0 buffer for h_out
            compiler_params=pltpu.CompilerParams(
                dimension_semantics=("parallel",),
                vmem_limit_bytes=vmem_limit),
        )(x_cm, h_cm, self.w_pre_t, self.b_pre, self.w_x_t, self.b_cell,
          self.w_h_t, self.w_post_t, self.b_post)
        return out_cm, h_out_cm

    @functools.partial(jax.jit, static_argnums=(0, 3))
    def _forward_impl(self, inputs, state, num_timesteps):
        n, _, h, w = inputs[0].shape
        # harbor policy: concatenate along channels (NCHW), then convert once
        # to the lane-dense (C, M) compute layout (single pass, padded only
        # when M is not a multiple of 128).
        harbor = jnp.concatenate(inputs, axis=1)
        x_cm = _nchw_to_cm(harbor).astype(self.compute_dtype)
        h_cm = _nchw_to_cm(state).astype(jnp.float32)

        m = x_cm.shape[1]
        m_pad = ((m + 127) // 128) * 128
        if m_pad != m:
            x_cm = jnp.pad(x_cm, ((0, 0), (0, m_pad - m)))
            h_cm = jnp.pad(h_cm, ((0, 0), (0, m_pad - m)))

        out_cm, h_out_cm = self._pallas_recurrence(x_cm, h_cm, num_timesteps)

        out_cm = out_cm[:, :m]
        h_out_cm = h_out_cm[:, :m]
        output = _cm_to_nchw(out_cm, n, h, w)
        new_state = _cm_to_nchw(h_out_cm, n, h, w)
        return output, new_state

    # --------------------------------------------------------------- user API
    def forward(self, inputs=None, input_types=None, state=None,
                curr_timestep=None):
        """Single-timestep forward (pt_tnn RecurrentModule.forward semantics)."""
        assert inputs is not None
        self._check_input_shapes(inputs)
        if state is None:
            state = self.zero_state(inputs[0].shape[0])
        # TODO(synk): curr_timestep accepted but unused (no timestep-wise
        #             conditioning modeled in pre/post memory).
        return self._forward_impl(tuple(inputs), state, 1)

    def forward_unrolled(self, inputs, num_timesteps, input_types=None,
                         state=None):
        """Run `num_timesteps` steps of the recurrence (same inputs each step)
        inside ONE fused kernel; returns the last output and final state."""
        assert inputs is not None
        self._check_input_shapes(inputs)
        if state is None:
            state = self.zero_state(inputs[0].shape[0])
        return self._forward_impl(tuple(inputs), state, int(num_timesteps))

    __call__ = forward

    # -------------------------------------------------------- fp32 reference
    def reference_forward(self, inputs, state, num_timesteps):
        """Pure-JAX fp32 NCHW reference (1x1 convs) of the same module."""
        hp = lax.Precision.HIGHEST
        harbor = jnp.concatenate([i.astype(jnp.float32) for i in inputs], axis=1)

        def conv1x1(w_t, b, x):
            y = jnp.einsum('oi,nihw->nohw', w_t.astype(jnp.float32), x,
                           precision=hp)
            return y + b.reshape(1, -1, 1, 1)

        pre = jax.nn.relu(conv1x1(self.w_pre_t, self.b_pre, harbor))
        h = state.astype(jnp.float32)
        for _ in range(num_timesteps):
            z = conv1x1(self.w_x_t, self.b_cell, pre) + jnp.einsum(
                'oi,nihw->nohw', self.w_h_t.astype(jnp.float32), h, precision=hp)
            h = jnp.tanh(z)
        y = conv1x1(self.w_post_t, self.b_post, h)
        if self.residual:
            y = y + harbor
        return jax.nn.relu(y), h


# ---------------------------------- main -------------------------------------

if __name__ == "__main__":
    batch, cin, spatial, hidden = 2, 4, 16, 32
    num_timesteps = 3

    module = RecurrentModuleTPU(
        in_channels_per_input=cin, num_inputs=2, hidden_channels=hidden,
        spatial=spatial, residual=True, seed=0)

    key = jax.random.PRNGKey(0)
    k1, k2 = jax.random.split(key)
    x1 = jax.random.normal(k1, (batch, cin, spatial, spatial), jnp.float32)
    x2 = jax.random.normal(k2, (batch, cin, spatial, spatial), jnp.float32)
    inputs = [x1, x2]

    # Fast path: the whole T-step recurrence in ONE pallas_call
    # (hidden state carried inside the kernel, never touching HBM).
    out_fused, state_fused = module.forward_unrolled(inputs, num_timesteps)

    # Per-timestep path (original module.forward semantics) for cross-checking.
    state = None
    out_step = None
    for t in range(num_timesteps):
        out_step, state = module(inputs=inputs, state=state, curr_timestep=t)

    # Pure-JAX fp32 NCHW reference (validates layout + numerics, not just
    # self-consistency of the kernel).
    out_ref, state_ref = module.reference_forward(
        inputs, module.zero_state(batch), num_timesteps)

    out_fused = jax.block_until_ready(out_fused)
    state_fused = jax.block_until_ready(state_fused)
    out_step = jax.block_until_ready(out_step)
    state = jax.block_until_ready(state)
    out_ref = jax.block_until_ready(out_ref)
    state_ref = jax.block_until_ready(state_ref)

    assert out_fused.shape == (batch, module.out_channels, spatial, spatial)
    assert state_fused.shape == (batch, hidden, spatial, spatial)
    assert bool(jnp.all(jnp.isfinite(out_fused)))
    # fused single-kernel unroll vs. T separate forward() calls
    assert bool(jnp.allclose(out_fused, out_step, atol=1e-5, rtol=1e-5))
    assert bool(jnp.allclose(state_fused, state, atol=1e-5, rtol=1e-5))
    # kernel vs. pure-JAX fp32 reference
    assert bool(jnp.allclose(out_fused, out_ref, atol=2e-3, rtol=2e-3))
    assert bool(jnp.allclose(state_fused, state_ref, atol=2e-3, rtol=2e-3))
    print("KERNEL_OK")
</pallas_src>

<mosaic_0001>
module attributes {stable_mosaic.version = 11 : i64} {
  func.func @_fused_recurrence_kernel(%arg0: i32, %arg1: memref<8x256xf32, #tpu.memory_space<vmem>>, %arg2: memref<32x256xf32, #tpu.memory_space<vmem>>, %arg3: memref<32x8xf32, #tpu.memory_space<vmem>>, %arg4: memref<32x1xf32, #tpu.memory_space<vmem>>, %arg5: memref<32x32xf32, #tpu.memory_space<vmem>>, %arg6: memref<32x1xf32, #tpu.memory_space<vmem>>, %arg7: memref<32x32xf32, #tpu.memory_space<vmem>>, %arg8: memref<8x32xf32, #tpu.memory_space<vmem>>, %arg9: memref<8x1xf32, #tpu.memory_space<vmem>>, %arg10: memref<8x256xf32, #tpu.memory_space<vmem>>, %arg11: memref<32x256xf32, #tpu.memory_space<vmem>>) attributes {dimension_semantics = [#tpu.dimension_semantics<parallel>], iteration_bounds = array<i64: 2>, scalar_prefetch = 0 : i64, scratch_operands = 0 : i64, tpu.core_type = #tpu.core_type<tc>, window_params = [{transform_indices = @transform_0, window_bounds = array<i64: 8, 256>}, {transform_indices = @transform_1, window_bounds = array<i64: 32, 256>}, {pipeline_mode = #tpu.pipeline_mode<synchronous>, transform_indices = @transform_2, window_bounds = array<i64: 32, 8>}, {pipeline_mode = #tpu.pipeline_mode<synchronous>, transform_indices = @transform_3, window_bounds = array<i64: 32, 1>}, {pipeline_mode = #tpu.pipeline_mode<synchronous>, transform_indices = @transform_4, window_bounds = array<i64: 32, 32>}, {pipeline_mode = #tpu.pipeline_mode<synchronous>, transform_indices = @transform_5, window_bounds = array<i64: 32, 1>}, {pipeline_mode = #tpu.pipeline_mode<synchronous>, transform_indices = @transform_6, window_bounds = array<i64: 32, 32>}, {pipeline_mode = #tpu.pipeline_mode<synchronous>, transform_indices = @transform_7, window_bounds = array<i64: 8, 32>}, {pipeline_mode = #tpu.pipeline_mode<synchronous>, transform_indices = @transform_8, window_bounds = array<i64: 8, 1>}, {transform_indices = @transform_9, window_bounds = array<i64: 8, 256>}, {transform_indices = @transform_10, window_bounds = array<i64: 32, 256>}]} {
    %c0 = arith.constant 0 : index
    %c0_0 = arith.constant 0 : index
    %0 = vector.load %arg1[%c0, %c0_0] : memref<8x256xf32, #tpu.memory_space<vmem>>, vector<8x256xf32>
    %c0_1 = arith.constant 0 : index
    %c0_2 = arith.constant 0 : index
    %1 = vector.load %arg3[%c0_1, %c0_2] : memref<32x8xf32, #tpu.memory_space<vmem>>, vector<32x8xf32>
    %cst = arith.constant dense<0.000000e+00> : vector<32x256xf32>
    %2 = tpu.matmul %1, %0, %cst {dimension_numbers = #tpu.dot_dimension_numbers<[1], [0], [0], [1], [0, 0, 1, 1], [], []>} : vector<32x8xf32>, vector<8x256xf32>, vector<32x256xf32> -> vector<32x256xf32>
    %c0_3 = arith.constant 0 : index
    %c0_4 = arith.constant 0 : index
    %3 = vector.load %arg4[%c0_3, %c0_4] : memref<32x1xf32, #tpu.memory_space<vmem>>, vector<32x1xf32>
    %4 = vector.broadcast %3 : vector<32x1xf32> to vector<32x256xf32>
    %5 = arith.addf %2, %4 : vector<32x256xf32>
    %cst_5 = arith.constant 0.000000e+00 : f32
    %6 = vector.broadcast %cst_5 : f32 to vector<32x256xf32>
    %7 = arith.maximumf %5, %6 : vector<32x256xf32>
    %c0_6 = arith.constant 0 : index
    %c0_7 = arith.constant 0 : index
    %8 = vector.load %arg5[%c0_6, %c0_7] : memref<32x32xf32, #tpu.memory_space<vmem>>, vector<32x32xf32>
    %cst_8 = arith.constant dense<0.000000e+00> : vector<32x256xf32>
    %9 = tpu.matmul %8, %7, %cst_8 {dimension_numbers = #tpu.dot_dimension_numbers<[1], [0], [0], [1], [0, 0, 1, 1], [], []>} : vector<32x32xf32>, vector<32x256xf32>, vector<32x256xf32> -> vector<32x256xf32>
    %c0_9 = arith.constant 0 : index
    %c0_10 = arith.constant 0 : index
    %10 = vector.load %arg6[%c0_9, %c0_10] : memref<32x1xf32, #tpu.memory_space<vmem>>, vector<32x1xf32>
    %11 = vector.broadcast %10 : vector<32x1xf32> to vector<32x256xf32>
    %12 = arith.addf %9, %11 : vector<32x256xf32>
    %c0_11 = arith.constant 0 : index
    %c0_12 = arith.constant 0 : index
    %13 = vector.load %arg7[%c0_11, %c0_12] : memref<32x32xf32, #tpu.memory_space<vmem>>, vector<32x32xf32>
    %c0_13 = arith.constant 0 : index
    %c0_14 = arith.constant 0 : index
    %14 = vector.load %arg2[%c0_13, %c0_14] : memref<32x256xf32, #tpu.memory_space<vmem>>, vector<32x256xf32>
    %c0_i32 = arith.constant 0 : i32
    %cst_15 = arith.constant dense<0.000000e+00> : vector<32x256xf32>
    %15 = tpu.matmul %13, %14, %cst_15 {dimension_numbers = #tpu.dot_dimension_numbers<[1], [0], [0], [1], [0, 0, 1, 1], [], []>} : vector<32x32xf32>, vector<32x256xf32>, vector<32x256xf32> -> vector<32x256xf32>
    %16 = arith.addf %12, %15 : vector<32x256xf32>
    %17 = math.tanh %16 : vector<32x256xf32>
    %c1_i32 = arith.constant 1 : i32
    %cst_16 = arith.constant dense<0.000000e+00> : vector<32x256xf32>
    %18 = tpu.matmul %13, %17, %cst_16 {dimension_numbers = #tpu.dot_dimension_numbers<[1], [0], [0], [1], [0, 0, 1, 1], [], []>} : vector<32x32xf32>, vector<32x256xf32>, vector<32x256xf32> -> vector<32x256xf32>
    %19 = arith.addf %12, %18 : vector<32x256xf32>
    %20 = math.tanh %19 : vector<32x256xf32>
    %c2_i32 = arith.constant 2 : i32
    %cst_17 = arith.constant dense<0.000000e+00> : vector<32x256xf32>
    %21 = tpu.matmul %13, %20, %cst_17 {dimension_numbers = #tpu.dot_dimension_numbers<[1], [0], [0], [1], [0, 0, 1, 1], [], []>} : vector<32x32xf32>, vector<32x256xf32>, vector<32x256xf32> -> vector<32x256xf32>
    %22 = arith.addf %12, %21 : vector<32x256xf32>
    %23 = math.tanh %22 : vector<32x256xf32>
    %c0_18 = arith.constant 0 : index
    %c0_19 = arith.constant 0 : index
    %24 = vector.load %arg8[%c0_18, %c0_19] : memref<8x32xf32, #tpu.memory_space<vmem>>, vector<8x32xf32>
    %cst_20 = arith.constant dense<0.000000e+00> : vector<8x256xf32>
    %25 = tpu.matmul %24, %23, %cst_20 {dimension_numbers = #tpu.dot_dimension_numbers<[1], [0], [0], [1], [0, 0, 1, 1], [], []>} : vector<8x32xf32>, vector<32x256xf32>, vector<8x256xf32> -> vector<8x256xf32>
    %c0_21 = arith.constant 0 : index
    %c0_22 = arith.constant 0 : index
    %26 = vector.load %arg9[%c0_21, %c0_22] : memref<8x1xf32, #tpu.memory_space<vmem>>, vector<8x1xf32>
    %27 = vector.broadcast %26 : vector<8x1xf32> to vector<8x256xf32>
    %28 = arith.addf %25, %27 : vector<8x256xf32>
    %29 = arith.addf %28, %0 : vector<8x256xf32>
    %cst_23 = arith.constant 0.000000e+00 : f32
    %30 = vector.broadcast %cst_23 : f32 to vector<8x256xf32>
    %31 = arith.maximumf %29, %30 : vector<8x256xf32>
    %c0_24 = arith.constant 0 : index
    %c0_25 = arith.constant 0 : index
    %32 = vector.load %arg10[%c0_24, %c0_25] : memref<8x256xf32, #tpu.memory_space<vmem>>, vector<8x256xf32>
    tpu.vector_store %arg10[%c0_24, %c0_25], %31 {strides = array<i32>} : memref<8x256xf32, #tpu.memory_space<vmem>>, vector<8x256xf32>,
    %c0_26 = arith.constant 0 : index
    %c0_27 = arith.constant 0 : index
    %33 = vector.load %arg11[%c0_26, %c0_27] : memref<32x256xf32, #tpu.memory_space<vmem>>, vector<32x256xf32>
    tpu.vector_store %arg11[%c0_26, %c0_27], %23 {strides = array<i32>} : memref<32x256xf32, #tpu.memory_space<vmem>>, vector<32x256xf32>,
    return
  }
  func.func @transform_0(%arg0: i32) -> (i32, i32) {
    %c0_i32 = arith.constant 0 : i32
    %c0_i32_0 = arith.constant 0 : i32
    return %c0_i32, %arg0 : i32, i32
  }
  func.func @transform_1(%arg0: i32) -> (i32, i32) {
    %c0_i32 = arith.constant 0 : i32
    %c0_i32_0 = arith.constant 0 : i32
    return %c0_i32, %arg0 : i32, i32
  }
  func.func @transform_2(%arg0: i32) -> (i32, i32) {
    %c0_i32 = arith.constant 0 : i32
    %c0_i32_0 = arith.constant 0 : i32
    %c0_i32_1 = arith.constant 0 : i32
    return %c0_i32, %c0_i32_0 : i32, i32
  }
  func.func @transform_3(%arg0: i32) -> (i32, i32) {
    %c0_i32 = arith.constant 0 : i32
    %c0_i32_0 = arith.constant 0 : i32
    %c0_i32_1 = arith.constant 0 : i32
    return %c0_i32, %c0_i32_0 : i32, i32
  }
  func.func @transform_4(%arg0: i32) -> (i32, i32) {
    %c0_i32 = arith.constant 0 : i32
    %c0_i32_0 = arith.constant 0 : i32
    %c0_i32_1 = arith.constant 0 : i32
    return %c0_i32, %c0_i32_0 : i32, i32
  }
  func.func @transform_5(%arg0: i32) -> (i32, i32) {
    %c0_i32 = arith.constant 0 : i32
    %c0_i32_0 = arith.constant 0 : i32
    %c0_i32_1 = arith.constant 0 : i32
    return %c0_i32, %c0_i32_0 : i32, i32
  }
  func.func @transform_6(%arg0: i32) -> (i32, i32) {
    %c0_i32 = arith.constant 0 : i32
    %c0_i32_0 = arith.constant 0 : i32
    %c0_i32_1 = arith.constant 0 : i32
    return %c0_i32, %c0_i32_0 : i32, i32
  }
  func.func @transform_7(%arg0: i32) -> (i32, i32) {
    %c0_i32 = arith.constant 0 : i32
    %c0_i32_0 = arith.constant 0 : i32
    %c0_i32_1 = arith.constant 0 : i32
    return %c0_i32, %c0_i32_0 : i32, i32
  }
  func.func @transform_8(%arg0: i32) -> (i32, i32) {
    %c0_i32 = arith.constant 0 : i32
    %c0_i32_0 = arith.constant 0 : i32
    %c0_i32_1 = arith.constant 0 : i32
    return %c0_i32, %c0_i32_0 : i32, i32
  }
  func.func @transform_9(%arg0: i32) -> (i32, i32) {
    %c0_i32 = arith.constant 0 : i32
    %c0_i32_0 = arith.constant 0 : i32
    return %c0_i32, %arg0 : i32, i32
  }
  func.func @transform_10(%arg0: i32) -> (i32, i32) {
    %c0_i32 = arith.constant 0 : i32
    %c0_i32_0 = arith.constant 0 : i32
    return %c0_i32, %arg0 : i32, i32
  }
}

</mosaic_0001>

<llo_original>
// kernel: _forward_impl.1
$region0: #{_forward_impl.1}
  #allocation0 [shape = 'u32[]', space=smem, size = 0x4, offset = 0x4, fixed_abs, tag = 'smem constant byte address 0x4 - core index']
  #allocation1 [shape = 'u32[144,128]{1,0:T(1,128)}', space=vmem, size = 0x12000, scoped, tag = 'internal scratch']
  %s0 = inlined_call_operand.vmem [shape: f32[8,512], index: 0, kind: input, shape index: {}]
  %s1 = inlined_call_operand.vmem [shape: f32[32,512], index: 1, kind: input, shape index: {}, may-alias: {1,10}]
  %s2 = inlined_call_operand.vmem [shape: f32[32,8], index: 2, kind: input, shape index: {}]
  %s3 = inlined_call_operand.vmem [shape: f32[32,1], index: 3, kind: input, shape index: {}]
  %s4 = inlined_call_operand.vmem [shape: f32[32,32], index: 4, kind: input, shape index: {}]
  %s5 = inlined_call_operand.vmem [shape: f32[32,1], index: 5, kind: input, shape index: {}]
  %s6 = inlined_call_operand.vmem [shape: f32[32,32], index: 6, kind: input, shape index: {}]
  %s7 = inlined_call_operand.vmem [shape: f32[8,32], index: 7, kind: input, shape index: {}]
  %s8 = inlined_call_operand.vmem [shape: f32[8,1], index: 8, kind: input, shape index: {}]
  %s9 = inlined_call_operand.vmem [shape: f32[8,512], index: 9, kind: output, shape index: {0}]
  %s10 = inlined_call_operand.vmem [shape: f32[32,512], index: 10, kind: output, shape index: {1}, may-alias: {1,10}]
  %11 = xla_tuple %s9, %s10
  %s12 = sld [smem:[#allocation0]]
  $region119: #{_forward_impl.1} parent=0
    _
  %s14 = ssub.s32 1, %s12
  %s15 = scalar_select 0, %s14, %s12
  $region1: #{_forward_impl.1} parent=0
    #allocation2 [shape = 'u8[65536]{0}', space=vmem, size = 0x10000, scoped, tag = 'input window, operand 1']
    #allocation3 [shape = 'u8[65536]{0}', space=vmem, size = 0x10000, scoped, tag = 'output window, operand 1']
    loop: start=0, step=1, limit=4
    $region2: #{_forward_impl.1} parent=1 // loop_pre_header
      _
    $region3: #{_forward_impl.1} parent=1 // loop_header
      %s17 = sphi 0, %s21
      %p18 = scmp.ge.s32.totalorder %s17, 4
      %s27 = sphi 0, %s29
      %s30 = sphi 0, %s27
      %s31 = sphi 0, %s30
      %s47 = sphi 0, %s31
      %s53 = sphi 0, %s55
      %s56 = sphi 0, %s53
      %s57 = sphi 0, %s56
      %s73 = sphi 0, %s57
      %s77 = sphi 0, %s77
      %s79 = sphi 0, %s77
      %s80 = sphi 0, %s79
      %s94 = sphi 0, %s80
      %s98 = sphi 0, %s98
      %s100 = sphi 0, %s98
      %s101 = sphi 0, %s100
      %s115 = sphi 0, %s101
      %s119 = sphi 0, %s119
      %s121 = sphi 0, %s119
      %s122 = sphi 0, %s121
      %s136 = sphi 0, %s122
      %s140 = sphi 0, %s140
      %s142 = sphi 0, %s140
      %s143 = sphi 0, %s142
      %s157 = sphi 0, %s143
      %s161 = sphi 0, %s161
      %s163 = sphi 0, %s161
      %s164 = sphi 0, %s163
      %s178 = sphi 0, %s164
      %s182 = sphi 0, %s182
      %s184 = sphi 0, %s182
      %s185 = sphi 0, %s184
      %s199 = sphi 0, %s185
      %s203 = sphi 0, %s203
      %s205 = sphi 0, %s203
      %s206 = sphi 0, %s205
      %s220 = sphi 0, %s206
      %s226 = sphi 0, %s228
      %s229 = sphi 0, %s226
      %s230 = sphi 0, %s229
      %s246 = sphi 0, %s230
      %s252 = sphi 0, %s254
      %s255 = sphi 0, %s252
      %s256 = sphi 0, %s255
      %s272 = sphi 0, %s256
    $region4: #{_forward_impl.1} parent=1 // loop_header_branch
      %20 = sbr.rel (%p18) target = $region8
    $region5: #{_forward_impl.1} parent=1 // loop_body
      %s22 = ssub.s32 %s17, 1
      %s23 = ssub.s32 %s17, 2
      %s24 = sadd.s32 %s17, 1
      %s25 = ssub.s32 %s17, %s24
      %p26 = scmp.eq.s32.totalorder %s25, 0
      %s28 = sadd.s32 %s27, 1
      %s29 = scalar_select %p26, %s27, %s28
      %p32 = pneg %p26
      %p33 = scmp.eq.s32.totalorder %s17, 1
      %p34 = por %p32, %p33
      %p35 = scmp.ne.s32.totalorder %s27, %s30
      %p36 = scmp.eq.s32.totalorder %s17, 0
      %p37 = por %p35, %p36
      %p38 = scmp.ne.s32.totalorder %s27, %s30
      %p39 = scmp.eq.s32.totalorder %s22, 1
      %p40 = por %p38, %p39
      %p41 = scmp.ne.s32.totalorder %s30, %s31
      %p42 = scmp.eq.s32.totalorder %s22, 0
      %p43 = por %p41, %p42
      %p44 = scmp.ne.s32.totalorder %s30, %s31
      %p45 = scmp.eq.s32.totalorder %s23, 1
      %p46 = por %p44, %p45
      %p48 = scmp.ne.s32.totalorder %s31, %s47
      %p49 = scmp.eq.s32.totalorder %s23, 0
      %p50 = por %p48, %p49
      %s51 = ssub.s32 %s17, %s24
      %p52 = scmp.eq.s32.totalorder %s51, 0
      %s54 = sadd.s32 %s53, 1
      %s55 = scalar_select %p52, %s53, %s54
      %p58 = pneg %p52
      %p59 = scmp.eq.s32.totalorder %s17, 1
      %p60 = por %p58, %p59
      %p61 = scmp.ne.s32.totalorder %s53, %s56
      %p62 = scmp.eq.s32.totalorder %s17, 0
      %p63 = por %p61, %p62
      %p64 = scmp.ne.s32.totalorder %s53, %s56
      %p65 = scmp.eq.s32.totalorder %s22, 1
      %p66 = por %p64, %p65
      %p67 = scmp.ne.s32.totalorder %s56, %s57
      %p68 = scmp.eq.s32.totalorder %s22, 0
      %p69 = por %p67, %p68
      %p70 = scmp.ne.s32.totalorder %s56, %s57
      %p71 = scmp.eq.s32.totalorder %s23, 1
      %p72 = por %p70, %p71
      %p74 = scmp.ne.s32.totalorder %s57, %s73
      %p75 = scmp.eq.s32.totalorder %s23, 0
      %p76 = por %p74, %p75
      %s78 = sadd.s32 %s77, 1
      %p81 = scmp.eq.s32.totalorder %s17, 1
      %p82 = scmp.ne.s32.totalorder %s77, %s79
      %p83 = scmp.eq.s32.totalorder %s17, 0
      %p84 = por %p82, %p83
      %p85 = scmp.ne.s32.totalorder %s77, %s79
      %p86 = scmp.eq.s32.totalorder %s22, 1
      %p87 = por %p85, %p86
      %p88 = scmp.ne.s32.totalorder %s79, %s80
      %p89 = scmp.eq.s32.totalorder %s22, 0
      %p90 = por %p88, %p89
      %p91 = scmp.ne.s32.totalorder %s79, %s80
      %p92 = scmp.eq.s32.totalorder %s23, 1
      %p93 = por %p91, %p92
      %p95 = scmp.ne.s32.totalorder %s80, %s94
      %p96 = scmp.eq.s32.totalorder %s23, 0
      %p97 = por %p95, %p96
      %s99 = sadd.s32 %s98, 1
      %p102 = scmp.eq.s32.totalorder %s17, 1
      %p103 = scmp.ne.s32.totalorder %s98, %s100
      %p104 = scmp.eq.s32.totalorder %s17, 0
      %p105 = por %p103, %p104
      %p106 = scmp.ne.s32.totalorder %s98, %s100
      %p107 = scmp.eq.s32.totalorder %s22, 1
      %p108 = por %p106, %p107
      %p109 = scmp.ne.s32.totalorder %s100, %s101
      %p110 = scmp.eq.s32.totalorder %s22, 0
      %p111 = por %p109, %p110
      %p112 = scmp.ne.s32.totalorder %s100, %s101
      %p113 = scmp.eq.s32.totalorder %s23, 1
      %p114 = por %p112, %p113
      %p116 = scmp.ne.s32.totalorder %s101, %s115
      %p117 = scmp.eq.s32.totalorder %s23, 0
      %p118 = por %p116, %p117
      %s120 = sadd.s32 %s119, 1
      %p123 = scmp.eq.s32.totalorder %s17, 1
      %p124 = scmp.ne.s32.totalorder %s119, %s121
      %p125 = scmp.eq.s32.totalorder %s17, 0
      %p126 = por %p124, %p125
      %p127 = scmp.ne.s32.totalorder %s119, %s121
      %p128 = scmp.eq.s32.totalorder %s22, 1
      %p129 = por %p127, %p128
      %p130 = scmp.ne.s32.totalorder %s121, %s122
      %p131 = scmp.eq.s32.totalorder %s22, 0
      %p132 = por %p130, %p131
      %p133 = scmp.ne.s32.totalorder %s121, %s122
      %p134 = scmp.eq.s32.totalorder %s23, 1
      %p135 = por %p133, %p134
      %p137 = scmp.ne.s32.totalorder %s122, %s136
      %p138 = scmp.eq.s32.totalorder %s23, 0
      %p139 = por %p137, %p138
      %s141 = sadd.s32 %s140, 1
      %p144 = scmp.eq.s32.totalorder %s17, 1
      %p145 = scmp.ne.s32.totalorder %s140, %s142
      %p146 = scmp.eq.s32.totalorder %s17, 0
      %p147 = por %p145, %p146
      %p148 = scmp.ne.s32.totalorder %s140, %s142
      %p149 = scmp.eq.s32.totalorder %s22, 1
      %p150 = por %p148, %p149
      %p151 = scmp.ne.s32.totalorder %s142, %s143
      %p152 = scmp.eq.s32.totalorder %s22, 0
      %p153 = por %p151, %p152
      %p154 = scmp.ne.s32.totalorder %s142, %s143
      %p155 = scmp.eq.s32.totalorder %s23, 1
      %p156 = por %p154, %p155
      %p158 = scmp.ne.s32.totalorder %s143, %s157
      %p159 = scmp.eq.s32.totalorder %s23, 0
      %p160 = por %p158, %p159
      %s162 = sadd.s32 %s161, 1
      %p165 = scmp.eq.s32.totalorder %s17, 1
      %p166 = scmp.ne.s32.totalorder %s161, %s163
      %p167 = scmp.eq.s32.totalorder %s17, 0
      %p168 = por %p166, %p167
      %p169 = scmp.ne.s32.totalorder %s161, %s163
      %p170 = scmp.eq.s32.totalorder %s22, 1
      %p171 = por %p169, %p170
      %p172 = scmp.ne.s32.totalorder %s163, %s164
      %p173 = scmp.eq.s32.totalorder %s22, 0
      %p174 = por %p172, %p173
      %p175 = scmp.ne.s32.totalorder %s163, %s164
      %p176 = scmp.eq.s32.totalorder %s23, 1
      %p177 = por %p175, %p176
      %p179 = scmp.ne.s32.totalorder %s164, %s178
      %p180 = scmp.eq.s32.totalorder %s23, 0
      %p181 = por %p179, %p180
      %s183 = sadd.s32 %s182, 1
      %p186 = scmp.eq.s32.totalorder %s17, 1
      %p187 = scmp.ne.s32.totalorder %s182, %s184
      %p188 = scmp.eq.s32.totalorder %s17, 0
      %p189 = por %p187, %p188
      %p190 = scmp.ne.s32.totalorder %s182, %s184
      %p191 = scmp.eq.s32.totalorder %s22, 1
      %p192 = por %p190, %p191
      %p193 = scmp.ne.s32.totalorder %s184, %s185
      %p194 = scmp.eq.s32.totalorder %s22, 0
      %p195 = por %p193, %p194
      %p196 = scmp.ne.s32.totalorder %s184, %s185
      %p197 = scmp.eq.s32.totalorder %s23, 1
      %p198 = por %p196, %p197
      %p200 = scmp.ne.s32.totalorder %s185, %s199
      %p201 = scmp.eq.s32.totalorder %s23, 0
      %p202 = por %p200, %p201
      %s204 = sadd.s32 %s203, 1
      %p207 = scmp.eq.s32.totalorder %s17, 1
      %p208 = scmp.ne.s32.totalorder %s203, %s205
      %p209 = scmp.eq.s32.totalorder %s17, 0
      %p210 = por %p208, %p209
      %p211 = scmp.ne.s32.totalorder %s203, %s205
      %p212 = scmp.eq.s32.totalorder %s22, 1
      %p213 = por %p211, %p212
      %p214 = scmp.ne.s32.totalorder %s205, %s206
      %p215 = scmp.eq.s32.totalorder %s22, 0
      %p216 = por %p214, %p215
      %p217 = scmp.ne.s32.totalorder %s205, %s206
      %p218 = scmp.eq.s32.totalorder %s23, 1
      %p219 = por %p217, %p218
      %p221 = scmp.ne.s32.totalorder %s206, %s220
      %p222 = scmp.eq.s32.totalorder %s23, 0
      %p223 = por %p221, %p222
      %s224 = ssub.s32 %s17, %s24
      %p225 = scmp.eq.s32.totalorder %s224, 0
      %s227 = sadd.s32 %s226, 1
      %s228 = scalar_select %p225, %s226, %s227
      %p231 = pneg %p225
      %p232 = scmp.eq.s32.totalorder %s17, 1
      %p233 = por %p231, %p232
      %p234 = scmp.ne.s32.totalorder %s226, %s229
      %p235 = scmp.eq.s32.totalorder %s17, 0
      %p236 = por %p234, %p235
      %p237 = scmp.ne.s32.totalorder %s226, %s229
      %p238 = scmp.eq.s32.totalorder %s22, 1
      %p239 = por %p237, %p238
      %p240 = scmp.ne.s32.totalorder %s229, %s230
      %p241 = scmp.eq.s32.totalorder %s22, 0
      %p242 = por %p240, %p241
      %p243 = scmp.ne.s32.totalorder %s229, %s230
      %p244 = scmp.eq.s32.totalorder %s23, 1
      %p245 = por %p243, %p244
      %p247 = scmp.ne.s32.totalorder %s230, %s246
      %p248 = scmp.eq.s32.totalorder %s23, 0
      %p249 = por %p247, %p248
      %s250 = ssub.s32 %s17, %s24
      %p251 = scmp.eq.s32.totalorder %s250, 0
      %s253 = sadd.s32 %s252, 1
      %s254 = scalar_select %p251, %s252, %s253
      %p257 = pneg %p251
      %p258 = scmp.eq.s32.totalorder %s17, 1
      %p259 = por %p257, %p258
      %p260 = scmp.ne.s32.totalorder %s252, %s255
      %p261 = scmp.eq.s32.totalorder %s17, 0
      %p262 = por %p260, %p261
      %p263 = scmp.ne.s32.totalorder %s252, %s255
      %p264 = scmp.eq.s32.totalorder %s22, 1
      %p265 = por %p263, %p264
      %p266 = scmp.ne.s32.totalorder %s255, %s256
      %p267 = scmp.eq.s32.totalorder %s22, 0
      %p268 = por %p266, %p267
      %p269 = scmp.ne.s32.totalorder %s255, %s256
      %p270 = scmp.eq.s32.totalorder %s23, 1
      %p271 = por %p269, %p270
      %p273 = scmp.ne.s32.totalorder %s256, %s272
      %p274 = scmp.eq.s32.totalorder %s23, 0
      %p275 = por %p273, %p274
      %p276 = scmp.le.s32.totalorder 1, %s17
      %p277 = scmp.lt.s32.totalorder %s17, 3
      %p278 = pnand %p276, %p277
      %p279 = pneg %p278
      // Predicated region
      $region9: #{_forward_impl.1} parent=5 // pred_check
        _
      $region10: #{_forward_impl.1} parent=5 // pred_check_branch
        %281 = sbr.rel (%p278) target = $region12
      $region11: #{_forward_impl.1} parent=5 // pred_region
        %s282 = ssub.s32 %s17, 1
        // Predicated region
        $region13: #{_forward_impl.1} parent=11 // pred_check
          %p283 = pneg %p90
        $region14: #{_forward_impl.1} parent=11 // pred_check_branch
          %285 = sbr.rel (%p283) target = $region16
        $region15: #{_forward_impl.1} parent=11 // pred_region
          _
        $region16: #{_forward_impl.1} parent=11 // pred_fallthru
          _
        // Predicated region
        $region17: #{_forward_impl.1} parent=11 // pred_check
          %p286 = pneg %p111
        $region18: #{_forward_impl.1} parent=11 // pred_check_branch
          %288 = sbr.rel (%p286) target = $region20
        $region19: #{_forward_impl.1} parent=11 // pred_region
          _
        $region20: #{_forward_impl.1} parent=11 // pred_fallthru
          _
        // Predicated region
        $region21: #{_forward_impl.1} parent=11 // pred_check
          %p289 = pneg %p132
        $region22: #{_forward_impl.1} parent=11 // pred_check_branch
          %291 = sbr.rel (%p289) target = $region24
        $region23: #{_forward_impl.1} parent=11 // pred_region
          _
        $region24: #{_forward_impl.1} parent=11 // pred_fallthru
          _
        // Predicated region
        $region25: #{_forward_impl.1} parent=11 // pred_check
          %p292 = pneg %p153
        $region26: #{_forward_impl.1} parent=11 // pred_check_branch
          %294 = sbr.rel (%p292) target = $region28
        $region27: #{_forward_impl.1} parent=11 // pred_region
          _
        $region28: #{_forward_impl.1} parent=11 // pred_fallthru
          _
        // Predicated region
        $region29: #{_forward_impl.1} parent=11 // pred_check
          %p295 = pneg %p174
        $region30: #{_forward_impl.1} parent=11 // pred_check_branch
          %297 = sbr.rel (%p295) target = $region32
        $region31: #{_forward_impl.1} parent=11 // pred_region
          _
        $region32: #{_forward_impl.1} parent=11 // pred_fallthru
          _
        // Predicated region
        $region33: #{_forward_impl.1} parent=11 // pred_check
          %p298 = pneg %p195
        $region34: #{_forward_impl.1} parent=11 // pred_check_branch
          %300 = sbr.rel (%p298) target = $region36
        $region35: #{_forward_impl.1} parent=11 // pred_region
          _
        $region36: #{_forward_impl.1} parent=11 // pred_fallthru
          _
        // Predicated region
        $region37: #{_forward_impl.1} parent=11 // pred_check
          %p301 = pneg %p216
        $region38: #{_forward_impl.1} parent=11 // pred_check_branch
          %303 = sbr.rel (%p301) target = $region40
        $region39: #{_forward_impl.1} parent=11 // pred_region
          _
        $region40: #{_forward_impl.1} parent=11 // pred_fallthru
          _
      $region12: #{_forward_impl.1} parent=5 // pred_fallthru
        _
      %p304 = scmp.lt.s32.totalorder %s17, 2
      // Predicated region
      $region41: #{_forward_impl.1} parent=5 // pred_check
        %p305 = pneg %p304
      $region42: #{_forward_impl.1} parent=5 // pred_check_branch
        %307 = sbr.rel (%p305) target = $region44
      $region43: #{_forward_impl.1} parent=5 // pred_region
        // Predicated region
        $region45: #{_forward_impl.1} parent=43 // pred_check
          %p308 = pneg %p37
        $region46: #{_forward_impl.1} parent=43 // pred_check_branch
          %310 = sbr.rel (%p308) target = $region48
        $region47: #{_forward_impl.1} parent=43 // pred_region
          %s311 = smul.u32 2, %s17
          %p312 = scmp.lt.s32.totalorder %s311, 3
          %s313 = scalar_select %p312, %s311, 3
          %s314 = smul.addr %s313, 8
          %s315 = scalar_lea.vmem %s0, %s314
          %s316 = smul.u32 2, %s17
        $region48: #{_forward_impl.1} parent=43 // pred_fallthru
          _
        // Predicated region
        $region49: #{_forward_impl.1} parent=43 // pred_check
          %p317 = pneg %p63
        $region50: #{_forward_impl.1} parent=43 // pred_check_branch
          %319 = sbr.rel (%p317) target = $region52
        $region51: #{_forward_impl.1} parent=43 // pred_region
          %s320 = sand.u32 %s53, 1
          %s321 = sand.u32 %s53, 1
          %s322 = smul.addr %s321, 64
          %s323 = scalar_lea.vmem [#allocation2], %s322
          %s324 = smul.u32 2, %s17
          %s325 = smul.addr %s324, 8
          %s326 = scalar_lea.vmem %s1, %s325
          // Predicated region
          $region53: #{_forward_impl.1} parent=51 // pred_check
            _
          $region54: #{_forward_impl.1} parent=51 // pred_check_branch
            %328 = sbr.rel (0) target = $region56
          $region55: #{_forward_impl.1} parent=51 // pred_region
            // Predicated region
            $region57: #{_forward_impl.1} parent=55 // pred_check
              _
            $region58: #{_forward_impl.1} parent=55 // pred_check_branch
              %330 = sbr.rel (0) target = $region60
            $region59: #{_forward_impl.1} parent=55 // pred_region
              loop: start=0, step=1, limit=1
              $region61: #{_forward_impl.1} parent=59 // loop_pre_header
                _
              $region62: #{_forward_impl.1} parent=59 // loop_header
                %s332 = sphi 0, %s336
                %p333 = scmp.ge.s32.totalorder %s332, 1
                %s337 = sphi %s326, %s326
                %s338 = sphi %s323, %s323
              $region63: #{_forward_impl.1} parent=59 // loop_header_branch
                %335 = sbr.rel (%p333) target = $region67
              $region64: #{_forward_impl.1} parent=59 // loop_body
                %v339 = vld [vmem:[%s337] sm:$0xff]
                %340 = vst [vmem:[%s338] sm:$0xff] %v339
                %v341 = vld [vmem:[%s337 + $0x8] sm:$0xff]
                %342 = vst [vmem:[%s338 + $0x8] sm:$0xff] %v341
                %v343 = vld [vmem:[%s337 + $0x20] sm:$0xff]
                %344 = vst [vmem:[%s338 + $0x10] sm:$0xff] %v343
                %v345 = vld [vmem:[%s337 + $0x28] sm:$0xff]
                %346 = vst [vmem:[%s338 + $0x18] sm:$0xff] %v345
                %v347 = vld [vmem:[%s337 + $0x40] sm:$0xff]
                %348 = vst [vmem:[%s338 + $0x20] sm:$0xff] %v347
                %v349 = vld [vmem:[%s337 + $0x48] sm:$0xff]
                %350 = vst [vmem:[%s338 + $0x28] sm:$0xff] %v349
                %v351 = vld [vmem:[%s337 + $0x60] sm:$0xff]
                %352 = vst [vmem:[%s338 + $0x30] sm:$0xff] %v351
                %v353 = vld [vmem:[%s337 + $0x68] sm:$0xff]
                %354 = vst [vmem:[%s338 + $0x38] sm:$0xff] %v353
              $region65: #{_forward_impl.1} parent=59 // loop_footer
                %s336 = sadd.s32 1, %s332
              $region66: #{_forward_impl.1} parent=59 // loop_footer_branch
                %331 = sbr.rel target = $region62
              $region67: #{_forward_impl.1} parent=59 // loop_exit
                _
            $region60: #{_forward_impl.1} parent=55 // pred_fallthru
              _
            // Predicated region
            $region68: #{_forward_impl.1} parent=55 // pred_check
              _
            $region69: #{_forward_impl.1} parent=55 // pred_check_branch
              %356 = sbr.rel target = $region71
            $region70: #{_forward_impl.1} parent=55 // pred_region
              _
            $region71: #{_forward_impl.1} parent=55 // pred_fallthru
              _
          $region56: #{_forward_impl.1} parent=51 // pred_fallthru
            _
          %357 = vnop
        $region52: #{_forward_impl.1} parent=43 // pred_fallthru
          _
      $region44: #{_forward_impl.1} parent=5 // pred_fallthru
        _
      %p358 = scmp.le.s32.totalorder 1, %s17
      %p359 = scmp.lt.s32.totalorder %s17, 3
      %p360 = pnand %p358, %p359
      %p361 = pneg %p360
      // Predicated region
      $region72: #{_forward_impl.1} parent=5 // pred_check
        _
      $region73: #{_forward_impl.1} parent=5 // pred_check_branch
        %363 = sbr.rel (%p360) target = $region75
      $region74: #{_forward_impl.1} parent=5 // pred_region
        %s364 = ssub.s32 %s17, 1
        %s365 = sand.u32 %s56, 1
        %s366 = sand.u32 %s56, 1
        %s367 = smul.addr %s366, 64
        %s368 = scalar_lea.vmem [#allocation2], %s367
        // Predicated region
        $region76: #{_forward_impl.1} parent=74 // pred_check
          %p369 = pneg %p69
        $region77: #{_forward_impl.1} parent=74 // pred_check_branch
          %371 = sbr.rel (%p369) target = $region79
        $region78: #{_forward_impl.1} parent=74 // pred_region
          _
        $region79: #{_forward_impl.1} parent=74 // pred_fallthru
          _
        %s372 = smul.u32 2, %s22
        %p373 = scmp.lt.s32.totalorder %s372, 3
        %s374 = scalar_select %p373, %s372, 3
        %s375 = smul.addr %s374, 8
        %s376 = scalar_lea.vmem %s0, %s375
        %p377 = pneg %p43
        %p378 = pneg %p40
        %s379 = sand.u32 %s56, 1
        %s380 = sand.u32 %s56, 1
        %s381 = smul.addr %s380, 64
        %s382 = scalar_lea.vmem [#allocation2], %s381
        %p383 = pneg %p69
        %p384 = pneg %p66
        %p385 = pneg %p90
        %p386 = pneg %p87
        %p387 = pneg %p111
        %p388 = pneg %p108
        %p389 = pneg %p132
        %p390 = pneg %p129
        %p391 = pneg %p153
        %p392 = pneg %p150
        %p393 = pneg %p174
        %p394 = pneg %p171
        %p395 = pneg %p195
        %p396 = pneg %p192
        %p397 = pneg %p216
        %p398 = pneg %p213
        %p399 = pneg %p242
        %p400 = pneg %p239
        %s401 = smul.u32 2, %s22
        %p402 = scmp.lt.s32.totalorder %s401, 3
        %s403 = scalar_select %p402, %s401, 3
        %s404 = smul.addr %s403, 8
        %s405 = scalar_lea.vmem %s9, %s404
        %p406 = pneg %p268
        %p407 = pneg %p265
        %s408 = sand.u32 %s255, 1
        %s409 = sand.u32 %s255, 1
        %s410 = smul.addr %s409, 64
        %s411 = scalar_lea.vmem [#allocation3], %s410
        %s412 = smul.u32 2, %s22
        %p413 = scmp.lt.s32.totalorder %s412, 3
        %s414 = scalar_select %p413, %s412, 3
        %s415 = smul.addr %s414, 8
        %s416 = scalar_lea.vmem %s0, %s415
        %s417 = smul.u32 2, %s22
        %s418 = smul.u32 2, %s22
        %s419 = smul.u32 2, %s22
        %p420 = scmp.lt.s32.totalorder %s419, 3
        %s421 = scalar_select %p420, %s419, 3
        %s422 = smul.addr %s421, 8
        %s423 = scalar_lea.vmem %s9, %s422
        %s424 = smul.u32 2, %s22
        %s425 = smul.u32 2, %s22
        %v426 = vld [vmem:[%s416] sm:$0xff]
        %v427 = vld [vmem:[%s416 + $0x8] sm:$0xff]
        %v428 = vld [vmem:[%s2] sm:$0xff]
        %v429 = vld [vmem:[%s2 + $0x8] sm:$0xff]
        %v430 = vld [vmem:[%s2 + $0x10] sm:$0xff]
        %v431 = vld [vmem:[%s2 + $0x18] sm:$0xff]
        %v432 = vld [vmem:[%s3] sm:$0xff]
        %v433 = vld [vmem:[%s3 + $0x8] sm:$0xff]
        %v434 = vld [vmem:[%s3 + $0x10] sm:$0xff]
        %v435 = vld [vmem:[%s3 + $0x18] sm:$0xff]
        %437 = vset.pattern.permute.xlu0 0
        %438 = vperm.xlu0 %437, %v432
        %v439 = vpop.permute.xlu0 %438
        %442 = vset.pattern.permute.xlu0 0
        %443 = vperm.xlu0 %442, %v433
        %v444 = vpop.permute.xlu0 %443
        %447 = vset.pattern.permute.xlu0 0
        %448 = vperm.xlu0 %447, %v434
        %v449 = vpop.permute.xlu0 %448
        %452 = vset.pattern.permute.xlu0 0
        %453 = vperm.xlu0 %452, %v435
        %v454 = vpop.permute.xlu0 %453
        %vm456 = vcmask 64512
        %v458 = vsel %vm456, %v428, 0
        %v461 = vsel %vm456, %v429, 0
        %v464 = vsel %vm456, %v430, 0
        %v467 = vsel %vm456, %v431, 0
        %469 = vmatprep.subr.mxu0 %v427
        %470 = vmatpush1.msra.mxu0 %v426
        %471 = vmatprep.subr.mxu0 0.0
        %472 = vmatpush1.msra.mxu0 0.0
        %473 = vmatprep.subr.mxu0 0.0
        %474 = vmatpush1.msra.mxu0 0.0
        %475 = vmatprep.subr.mxu0 0.0
        %476 = vmatpush1.msra.mxu0 0.0
        %477 = vmatprep.subr.mxu0 0.0
        %478 = vmatpush1.msra.mxu0 0.0
        %479 = vmatprep.subr.mxu0 0.0
        %480 = vmatpush1.msra.mxu0 0.0
        %481 = vmatprep.subr.mxu0 0.0
        %482 = vmatpush1.msra.mxu0 0.0
        %483 = vmatprep.subr.mxu0 0.0
        %484 = vmatpush1.msra.mxu0 0.0
        %485 = vmatprep.subr.mxu0 0.0
        %486 = vmatpush1.msra.mxu0 0.0
        %487 = vmatprep.subr.mxu0 0.0
        %488 = vmatpush1.msra.mxu0 0.0
        %489 = vmatprep.subr.mxu0 0.0
        %490 = vmatpush1.msra.mxu0 0.0
        %491 = vmatprep.subr.mxu0 0.0
        %492 = vmatpush1.msra.mxu0 0.0
        %493 = vmatprep.subr.mxu0 0.0
        %494 = vmatpush1.msra.mxu0 0.0
        %495 = vmatprep.subr.mxu0 0.0
        %496 = vmatpush1.msra.mxu0 0.0
        %497 = vmatprep.subr.mxu0 0.0
        %498 = vmatpush1.msra.mxu0 0.0
        %499 = vmatprep.subr.mxu0 0.0
        %500 = vmatpush1.msra.mxu0 0.0
        %501 = vmatprep.subr.mxu0 0.0
        %502 = vmatpush1.msra.mxu0 0.0
        %503 = vmatprep.subr.mxu0 0.0
        %504 = vmatpush1.msra.mxu0 0.0
        %505 = vmatprep.subr.mxu0 0.0
        %506 = vmatpush1.msra.mxu0 0.0
        %507 = vmatprep.subr.mxu0 0.0
        %508 = vmatpush1.msra.mxu0 0.0
        %509 = vmatprep.subr.mxu0 0.0
        %510 = vmatpush1.msra.mxu0 0.0
        %511 = vmatprep.subr.mxu0 0.0
        %512 = vmatpush1.msra.mxu0 0.0
        %513 = vmatprep.subr.mxu0 0.0
        %514 = vmatpush1.msra.mxu0 0.0
        %515 = vmatprep.subr.mxu0 0.0
        %516 = vmatpush1.msra.mxu0 0.0
        %517 = vmatprep.subr.mxu0 0.0
        %518 = vmatpush1.msra.mxu0 0.0
        %519 = vmatprep.subr.mxu0 0.0
        %520 = vmatpush1.msra.mxu0 0.0
        %521 = vmatprep.subr.mxu0 0.0
        %522 = vmatpush1.msra.mxu0 0.0
        %523 = vmatprep.subr.mxu0 0.0
        %524 = vmatpush1.msra.mxu0 0.0
        %525 = vmatprep.subr.mxu0 0.0
        %526 = vmatpush1.msra.mxu0 0.0
        %527 = vmatprep.subr.mxu0 0.0
        %528 = vmatpush1.msra.mxu0 0.0
        %529 = vmatprep.subr.mxu0 0.0
        %530 = vmatpush1.msra.mxu0 0.0
        %531 = vmatprep.subr.mxu0 0.0
        %532 = vmatpush1.msra.mxu0 0.0
        %533 = vmatprep.mubr.f32.mxu0 0.0
        %534 = vmatmul.mubr.f32.gmra.mrb[0].mxu0 %v458
        %v535 = vpop.f32.mrb[0].mxu0
        %v536 = vadd.f32 %v439, %v535
        %v537 = vpop.f32.mrb[0].mxu0
        %v538 = vadd.f32 %v439, %v537
        %539 = vmatprep.mubr.f32.mxu0 0.0
        %540 = vmatmul.mubr.f32.gmra.mrb[0].mxu0 %v461
        %v541 = vpop.f32.mrb[0].mxu0
        %v542 = vadd.f32 %v444, %v541
        %v543 = vpop.f32.mrb[0].mxu0
        %v544 = vadd.f32 %v444, %v543
        %545 = vmatprep.mubr.f32.mxu0 0.0
        %546 = vmatmul.mubr.f32.gmra.mrb[0].mxu0 %v464
        %v547 = vpop.f32.mrb[0].mxu0
        %v548 = vadd.f32 %v449, %v547
        %v549 = vpop.f32.mrb[0].mxu0
        %v550 = vadd.f32 %v449, %v549
        %551 = vmatprep.mubr.f32.mxu0 0.0
        %552 = vmatmul.mubr.f32.gmra.mrb[0].mxu0 %v467
        %v553 = vpop.f32.mrb[0].mxu0
        %v554 = vadd.f32 %v454, %v553
        %v555 = vpop.f32.mrb[0].mxu0
        %v556 = vadd.f32 %v454, %v555
        %557 = vdwg.mxu0
        %v558 = vmax.f32 %v536, 0.0
        %v559 = vmax.f32 %v538, 0.0
        %v560 = vmax.f32 %v542, 0.0
        %v561 = vmax.f32 %v544, 0.0
        %v562 = vmax.f32 %v548, 0.0
        %v563 = vmax.f32 %v550, 0.0
        %v564 = vmax.f32 %v554, 0.0
        %v565 = vmax.f32 %v556, 0.0
        %v566 = vld [vmem:[%s4] sm:$0xff]
        %v567 = vld [vmem:[%s4 + $0x8] sm:$0xff]
        %v568 = vld [vmem:[%s4 + $0x10] sm:$0xff]
        %v569 = vld [vmem:[%s4 + $0x18] sm:$0xff]
        %v570 = vld [vmem:[%s5] sm:$0xff]
        %v571 = vld [vmem:[%s5 + $0x8] sm:$0xff]
        %v572 = vld [vmem:[%s5 + $0x10] sm:$0xff]
        %v573 = vld [vmem:[%s5 + $0x18] sm:$0xff]
        %575 = vset.pattern.permute.xlu0 0
        %576 = vperm.xlu0 %575, %v570
        %v577 = vpop.permute.xlu0 %576
        %580 = vset.pattern.permute.xlu0 0
        %581 = vperm.xlu0 %580, %v571
        %v582 = vpop.permute.xlu0 %581
        %585 = vset.pattern.permute.xlu0 0
        %586 = vperm.xlu0 %585, %v572
        %v587 = vpop.permute.xlu0 %586
        %590 = vset.pattern.permute.xlu0 0
        %591 = vperm.xlu0 %590, %v573
        %v592 = vpop.permute.xlu0 %591
        %vm594 = vcmask 261120
        %v596 = vsel %vm594, %v566, 0
        %v599 = vsel %vm594, %v567, 0
        %v602 = vsel %vm594, %v568, 0
        %v605 = vsel %vm594, %v569, 0
        %607 = vmatprep.subr.mxu0 %v559
        %608 = vmatpush1.msra.mxu0 %v558
        %609 = vmatprep.subr.mxu0 %v561
        %610 = vmatpush1.msra.mxu0 %v560
        %611 = vmatprep.subr.mxu0 %v563
        %612 = vmatpush1.msra.mxu0 %v562
        %613 = vmatprep.subr.mxu0 %v565
        %614 = vmatpush1.msra.mxu0 %v564
        %615 = vmatprep.subr.mxu0 0.0
        %616 = vmatpush1.msra.mxu0 0.0
        %617 = vmatprep.subr.mxu0 0.0
        %618 = vmatpush1.msra.mxu0 0.0
        %619 = vmatprep.subr.mxu0 0.0
        %620 = vmatpush1.msra.mxu0 0.0
        %621 = vmatprep.subr.mxu0 0.0
        %622 = vmatpush1.msra.mxu0 0.0
        %623 = vmatprep.subr.mxu0 0.0
        %624 = vmatpush1.msra.mxu0 0.0
        %625 = vmatprep.subr.mxu0 0.0
        %626 = vmatpush1.msra.mxu0 0.0
        %627 = vmatprep.subr.mxu0 0.0
        %628 = vmatpush1.msra.mxu0 0.0
        %629 = vmatprep.subr.mxu0 0.0
        %630 = vmatpush1.msra.mxu0 0.0
        %631 = vmatprep.subr.mxu0 0.0
        %632 = vmatpush1.msra.mxu0 0.0
        %633 = vmatprep.subr.mxu0 0.0
        %634 = vmatpush1.msra.mxu0 0.0
        %635 = vmatprep.subr.mxu0 0.0
        %636 = vmatpush1.msra.mxu0 0.0
        %637 = vmatprep.subr.mxu0 0.0
        %638 = vmatpush1.msra.mxu0 0.0
        %639 = vmatprep.subr.mxu0 0.0
        %640 = vmatpush1.msra.mxu0 0.0
        %641 = vmatprep.subr.mxu0 0.0
        %642 = vmatpush1.msra.mxu0 0.0
        %643 = vmatprep.subr.mxu0 0.0
        %644 = vmatpush1.msra.mxu0 0.0
        %645 = vmatprep.subr.mxu0 0.0
        %646 = vmatpush1.msra.mxu0 0.0
        %647 = vmatprep.subr.mxu0 0.0
        %648 = vmatpush1.msra.mxu0 0.0
        %649 = vmatprep.subr.mxu0 0.0
        %650 = vmatpush1.msra.mxu0 0.0
        %651 = vmatprep.subr.mxu0 0.0
        %652 = vmatpush1.msra.mxu0 0.0
        %653 = vmatprep.subr.mxu0 0.0
        %654 = vmatpush1.msra.mxu0 0.0
        %655 = vmatprep.subr.mxu0 0.0
        %656 = vmatpush1.msra.mxu0 0.0
        %657 = vmatprep.subr.mxu0 0.0
        %658 = vmatpush1.msra.mxu0 0.0
        %659 = vmatprep.subr.mxu0 0.0
        %660 = vmatpush1.msra.mxu0 0.0
        %661 = vmatprep.subr.mxu0 0.0
        %662 = vmatpush1.msra.mxu0 0.0
        %663 = vmatprep.subr.mxu0 0.0
        %664 = vmatpush1.msra.mxu0 0.0
        %665 = vmatprep.subr.mxu0 0.0
        %666 = vmatpush1.msra.mxu0 0.0
        %667 = vmatprep.subr.mxu0 0.0
        %668 = vmatpush1.msra.mxu0 0.0
        %669 = vmatprep.subr.mxu0 0.0
        %670 = vmatpush1.msra.mxu0 0.0
        %671 = vmatprep.mubr.f32.mxu0 0.0
        %672 = vmatmul.mubr.f32.gmra.mrb[0].mxu0 %v596
        %v673 = vpop.f32.mrb[0].mxu0
        %v674 = vadd.f32 %v577, %v673
        %v675 = vpop.f32.mrb[0].mxu0
        %v676 = vadd.f32 %v577, %v675
        %677 = vmatprep.mubr.f32.mxu0 0.0
        %678 = vmatmul.mubr.f32.gmra.mrb[0].mxu0 %v599
        %v679 = vpop.f32.mrb[0].mxu0
        %v680 = vadd.f32 %v582, %v679
        %v681 = vpop.f32.mrb[0].mxu0
        %v682 = vadd.f32 %v582, %v681
        %683 = vmatprep.mubr.f32.mxu0 0.0
        %684 = vmatmul.mubr.f32.gmra.mrb[0].mxu0 %v602
        %v685 = vpop.f32.mrb[0].mxu0
        %v686 = vadd.f32 %v587, %v685
        %v687 = vpop.f32.mrb[0].mxu0
        %v688 = vadd.f32 %v587, %v687
        %689 = vmatprep.mubr.f32.mxu0 0.0
        %690 = vmatmul.mubr.f32.gmra.mrb[0].mxu0 %v605
        %v691 = vpop.f32.mrb[0].mxu0
        %v692 = vadd.f32 %v592, %v691
        %v693 = vpop.f32.mrb[0].mxu0
        %v694 = vadd.f32 %v592, %v693
        %695 = vdwg.mxu0
        %v696 = vld [vmem:[%s6] sm:$0xff]
        %v697 = vld [vmem:[%s6 + $0x8] sm:$0xff]
        %v698 = vld [vmem:[%s6 + $0x10] sm:$0xff]
        %v699 = vld [vmem:[%s6 + $0x18] sm:$0xff]
        %v700 = vld [vmem:[%s368] sm:$0xff]
        %v701 = vld [vmem:[%s368 + $0x8] sm:$0xff]
        %v702 = vld [vmem:[%s368 + $0x10] sm:$0xff]
        %v703 = vld [vmem:[%s368 + $0x18] sm:$0xff]
        %v704 = vld [vmem:[%s368 + $0x20] sm:$0xff]
        %v705 = vld [vmem:[%s368 + $0x28] sm:$0xff]
        %v706 = vld [vmem:[%s368 + $0x30] sm:$0xff]
        %v707 = vld [vmem:[%s368 + $0x38] sm:$0xff]
        %v709 = vsel %vm594, %v696, 0
        %v712 = vsel %vm594, %v697, 0
        %v715 = vsel %vm594, %v698, 0
        %v718 = vsel %vm594, %v699, 0
        %720 = vmatprep.subr.mxu0 %v701
        %721 = vmatpush1.msra.mxu0 %v700
        %722 = vmatprep.subr.mxu0 %v703
        %723 = vmatpush1.msra.mxu0 %v702
        %724 = vmatprep.subr.mxu0 %v705
        %725 = vmatpush1.msra.mxu0 %v704
        %726 = vmatprep.subr.mxu0 %v707
        %727 = vmatpush1.msra.mxu0 %v706
        %728 = vmatprep.subr.mxu0 0.0
        %729 = vmatpush1.msra.mxu0 0.0
        %730 = vmatprep.subr.mxu0 0.0
        %731 = vmatpush1.msra.mxu0 0.0
        %732 = vmatprep.subr.mxu0 0.0
        %733 = vmatpush1.msra.mxu0 0.0
        %734 = vmatprep.subr.mxu0 0.0
        %735 = vmatpush1.msra.mxu0 0.0
        %736 = vmatprep.subr.mxu0 0.0
        %737 = vmatpush1.msra.mxu0 0.0
        %738 = vmatprep.subr.mxu0 0.0
        %739 = vmatpush1.msra.mxu0 0.0
        %740 = vmatprep.subr.mxu0 0.0
        %741 = vmatpush1.msra.mxu0 0.0
        %742 = vmatprep.subr.mxu0 0.0
        %743 = vmatpush1.msra.mxu0 0.0
        %744 = vmatprep.subr.mxu0 0.0
        %745 = vmatpush1.msra.mxu0 0.0
        %746 = vmatprep.subr.mxu0 0.0
        %747 = vmatpush1.msra.mxu0 0.0
        %748 = vmatprep.subr.mxu0 0.0
        %749 = vmatpush1.msra.mxu0 0.0
        %750 = vmatprep.subr.mxu0 0.0
        %751 = vmatpush1.msra.mxu0 0.0
        %752 = vmatprep.subr.mxu0 0.0
        %753 = vmatpush1.msra.mxu0 0.0
        %754 = vmatprep.subr.mxu0 0.0
        %755 = vmatpush1.msra.mxu0 0.0
        %756 = vmatprep.subr.mxu0 0.0
        %757 = vmatpush1.msra.mxu0 0.0
        %758 = vmatprep.subr.mxu0 0.0
        %759 = vmatpush1.msra.mxu0 0.0
        %760 = vmatprep.subr.mxu0 0.0
        %761 = vmatpush1.msra.mxu0 0.0
        %762 = vmatprep.subr.mxu0 0.0
        %763 = vmatpush1.msra.mxu0 0.0
        %764 = vmatprep.subr.mxu0 0.0
        %765 = vmatpush1.msra.mxu0 0.0
        %766 = vmatprep.subr.mxu0 0.0
        %767 = vmatpush1.msra.mxu0 0.0
        %768 = vmatprep.subr.mxu0 0.0
        %769 = vmatpush1.msra.mxu0 0.0
        %770 = vmatprep.subr.mxu0 0.0
        %771 = vmatpush1.msra.mxu0 0.0
        %772 = vmatprep.subr.mxu0 0.0
        %773 = vmatpush1.msra.mxu0 0.0
        %774 = vmatprep.subr.mxu0 0.0
        %775 = vmatpush1.msra.mxu0 0.0
        %776 = vmatprep.subr.mxu0 0.0
        %777 = vmatpush1.msra.mxu0 0.0
        %778 = vmatprep.subr.mxu0 0.0
        %779 = vmatpush1.msra.mxu0 0.0
        %780 = vmatprep.subr.mxu0 0.0
        %781 = vmatpush1.msra.mxu0 0.0
        %782 = vmatprep.subr.mxu0 0.0
        %783 = vmatpush1.msra.mxu0 0.0
        %784 = vmatprep.mubr.f32.mxu0 0.0
        %785 = vmatmul.mubr.f32.gmra.mrb[0].mxu0 %v709
        %v786 = vpop.f32.mrb[0].mxu0
        %v787 = vadd.f32 0.0, %v786
        %v788 = vpop.f32.mrb[0].mxu0
        %v789 = vadd.f32 0.0, %v788
        %790 = vmatprep.mubr.f32.mxu0 0.0
        %791 = vmatmul.mubr.f32.gmra.mrb[0].mxu0 %v712
        %v792 = vpop.f32.mrb[0].mxu0
        %v793 = vadd.f32 0.0, %v792
        %v794 = vpop.f32.mrb[0].mxu0
        %v795 = vadd.f32 0.0, %v794
        %796 = vmatprep.mubr.f32.mxu0 0.0
        %797 = vmatmul.mubr.f32.gmra.mrb[0].mxu0 %v715
        %v798 = vpop.f32.mrb[0].mxu0
        %v799 = vadd.f32 0.0, %v798
        %v800 = vpop.f32.mrb[0].mxu0
        %v801 = vadd.f32 0.0, %v800
        %802 = vmatprep.mubr.f32.mxu0 0.0
        %803 = vmatmul.mubr.f32.gmra.mrb[0].mxu0 %v718
        %v804 = vpop.f32.mrb[0].mxu0
        %v805 = vadd.f32 0.0, %v804
        %v806 = vpop.f32.mrb[0].mxu0
        %v807 = vadd.f32 0.0, %v806
        %808 = vdwg.mxu0
        %v809 = vadd.f32 %v674, %v787
        %v810 = vadd.f32 %v676, %v789
        %v811 = vadd.f32 %v680, %v793
        %v812 = vadd.f32 %v682, %v795
        %v813 = vadd.f32 %v686, %v799
        %v814 = vadd.f32 %v688, %v801
        %v815 = vadd.f32 %v692, %v805
        %v816 = vadd.f32 %v694, %v807
        %v817 = vtanh.pop %v809
        %v818 = vtanh.pop %v810
        %v819 = vtanh.pop %v811
        %v820 = vtanh.pop %v812
        %v821 = vtanh.pop %v813
        %v822 = vtanh.pop %v814
        %v823 = vtanh.pop %v815
        %v824 = vtanh.pop %v816
        %825 = vmatprep.subr.mxu0 %v818
        %826 = vmatpush1.msra.mxu0 %v817
        %827 = vmatprep.subr.mxu0 %v820
        %828 = vmatpush1.msra.mxu0 %v819
        %829 = vmatprep.subr.mxu0 %v822
        %830 = vmatpush1.msra.mxu0 %v821
        %831 = vmatprep.subr.mxu0 %v824
        %832 = vmatpush1.msra.mxu0 %v823
        %833 = vmatprep.subr.mxu0 0.0
        %834 = vmatpush1.msra.mxu0 0.0
        %835 = vmatprep.subr.mxu0 0.0
        %836 = vmatpush1.msra.mxu0 0.0
        %837 = vmatprep.subr.mxu0 0.0
        %838 = vmatpush1.msra.mxu0 0.0
        %839 = vmatprep.subr.mxu0 0.0
        %840 = vmatpush1.msra.mxu0 0.0
        %841 = vmatprep.subr.mxu0 0.0
        %842 = vmatpush1.msra.mxu0 0.0
        %843 = vmatprep.subr.mxu0 0.0
        %844 = vmatpush1.msra.mxu0 0.0
        %845 = vmatprep.subr.mxu0 0.0
        %846 = vmatpush1.msra.mxu0 0.0
        %847 = vmatprep.subr.mxu0 0.0
        %848 = vmatpush1.msra.mxu0 0.0
        %849 = vmatprep.subr.mxu0 0.0
        %850 = vmatpush1.msra.mxu0 0.0
        %851 = vmatprep.subr.mxu0 0.0
        %852 = vmatpush1.msra.mxu0 0.0
        %853 = vmatprep.subr.mxu0 0.0
        %854 = vmatpush1.msra.mxu0 0.0
        %855 = vmatprep.subr.mxu0 0.0
        %856 = vmatpush1.msra.mxu0 0.0
        %857 = vmatprep.subr.mxu0 0.0
        %858 = vmatpush1.msra.mxu0 0.0
        %859 = vmatprep.subr.mxu0 0.0
        %860 = vmatpush1.msra.mxu0 0.0
        %861 = vmatprep.subr.mxu0 0.0
        %862 = vmatpush1.msra.mxu0 0.0
        %863 = vmatprep.subr.mxu0 0.0
        %864 = vmatpush1.msra.mxu0 0.0
        %865 = vmatprep.subr.mxu0 0.0
        %866 = vmatpush1.msra.mxu0 0.0
        %867 = vmatprep.subr.mxu0 0.0
        %868 = vmatpush1.msra.mxu0 0.0
        %869 = vmatprep.subr.mxu0 0.0
        %870 = vmatpush1.msra.mxu0 0.0
        %871 = vmatprep.subr.mxu0 0.0
        %872 = vmatpush1.msra.mxu0 0.0
        %873 = vmatprep.subr.mxu0 0.0
        %874 = vmatpush1.msra.mxu0 0.0
        %875 = vmatprep.subr.mxu0 0.0
        %876 = vmatpush1.msra.mxu0 0.0
        %877 = vmatprep.subr.mxu0 0.0
        %878 = vmatpush1.msra.mxu0 0.0
        %879 = vmatprep.subr.mxu0 0.0
        %880 = vmatpush1.msra.mxu0 0.0
        %881 = vmatprep.subr.mxu0 0.0
        %882 = vmatpush1.msra.mxu0 0.0
        %883 = vmatprep.subr.mxu0 0.0
        %884 = vmatpush1.msra.mxu0 0.0
        %885 = vmatprep.subr.mxu0 0.0
        %886 = vmatpush1.msra.mxu0 0.0
        %887 = vmatprep.subr.mxu0 0.0
        %888 = vmatpush1.msra.mxu0 0.0
        %889 = vmatprep.mubr.f32.mxu0 0.0
        %890 = vmatmul.mubr.f32.gmra.mrb[0].mxu0 %v709
        %v891 = vpop.f32.mrb[0].mxu0
        %v892 = vadd.f32 0.0, %v891
        %v893 = vpop.f32.mrb[0].mxu0
        %v894 = vadd.f32 0.0, %v893
        %895 = vmatprep.mubr.f32.mxu0 0.0
        %896 = vmatmul.mubr.f32.gmra.mrb[0].mxu0 %v712
        %v897 = vpop.f32.mrb[0].mxu0
        %v898 = vadd.f32 0.0, %v897
        %v899 = vpop.f32.mrb[0].mxu0
        %v900 = vadd.f32 0.0, %v899
        %901 = vmatprep.mubr.f32.mxu0 0.0
        %902 = vmatmul.mubr.f32.gmra.mrb[0].mxu0 %v715
        %v903 = vpop.f32.mrb[0].mxu0
        %v904 = vadd.f32 0.0, %v903
        %v905 = vpop.f32.mrb[0].mxu0
        %v906 = vadd.f32 0.0, %v905
        %907 = vmatprep.mubr.f32.mxu0 0.0
        %908 = vmatmul.mubr.f32.gmra.mrb[0].mxu0 %v718
        %v909 = vpop.f32.mrb[0].mxu0
        %v910 = vadd.f32 0.0, %v909
        %v911 = vpop.f32.mrb[0].mxu0
        %v912 = vadd.f32 0.0, %v911
        %913 = vdwg.mxu0
        %v914 = vadd.f32 %v674, %v892
        %v915 = vadd.f32 %v676, %v894
        %v916 = vadd.f32 %v680, %v898
        %v917 = vadd.f32 %v682, %v900
        %v918 = vadd.f32 %v686, %v904
        %v919 = vadd.f32 %v688, %v906
        %v920 = vadd.f32 %v692, %v910
        %v921 = vadd.f32 %v694, %v912
        %v922 = vtanh.pop %v914
        %v923 = vtanh.pop %v915
        %v924 = vtanh.pop %v916
        %v925 = vtanh.pop %v917
        %v926 = vtanh.pop %v918
        %v927 = vtanh.pop %v919
        %v928 = vtanh.pop %v920
        %v929 = vtanh.pop %v921
        %930 = vmatprep.subr.mxu0 %v923
        %931 = vmatpush1.msra.mxu0 %v922
        %932 = vmatprep.subr.mxu0 %v925
        %933 = vmatpush1.msra.mxu0 %v924
        %934 = vmatprep.subr.mxu0 %v927
        %935 = vmatpush1.msra.mxu0 %v926
        %936 = vmatprep.subr.mxu0 %v929
        %937 = vmatpush1.msra.mxu0 %v928
        %938 = vmatprep.subr.mxu0 0.0
        %939 = vmatpush1.msra.mxu0 0.0
        %940 = vmatprep.subr.mxu0 0.0
        %941 = vmatpush1.msra.mxu0 0.0
        %942 = vmatprep.subr.mxu0 0.0
        %943 = vmatpush1.msra.mxu0 0.0
        %944 = vmatprep.subr.mxu0 0.0
        %945 = vmatpush1.msra.mxu0 0.0
        %946 = vmatprep.subr.mxu0 0.0
        %947 = vmatpush1.msra.mxu0 0.0
        %948 = vmatprep.subr.mxu0 0.0
        %949 = vmatpush1.msra.mxu0 0.0
        %950 = vmatprep.subr.mxu0 0.0
        %951 = vmatpush1.msra.mxu0 0.0
        %952 = vmatprep.subr.mxu0 0.0
        %953 = vmatpush1.msra.mxu0 0.0
        %954 = vmatprep.subr.mxu0 0.0
        %955 = vmatpush1.msra.mxu0 0.0
        %956 = vmatprep.subr.mxu0 0.0
        %957 = vmatpush1.msra.mxu0 0.0
        %958 = vmatprep.subr.mxu0 0.0
        %959 = vmatpush1.msra.mxu0 0.0
        %960 = vmatprep.subr.mxu0 0.0
        %961 = vmatpush1.msra.mxu0 0.0
        %962 = vmatprep.subr.mxu0 0.0
        %963 = vmatpush1.msra.mxu0 0.0
        %964 = vmatprep.subr.mxu0 0.0
        %965 = vmatpush1.msra.mxu0 0.0
        %966 = vmatprep.subr.mxu0 0.0
        %967 = vmatpush1.msra.mxu0 0.0
        %968 = vmatprep.subr.mxu0 0.0
        %969 = vmatpush1.msra.mxu0 0.0
        %970 = vmatprep.subr.mxu0 0.0
        %971 = vmatpush1.msra.mxu0 0.0
        %972 = vmatprep.subr.mxu0 0.0
        %973 = vmatpush1.msra.mxu0 0.0
        %974 = vmatprep.subr.mxu0 0.0
        %975 = vmatpush1.msra.mxu0 0.0
        %976 = vmatprep.subr.mxu0 0.0
        %977 = vmatpush1.msra.mxu0 0.0
        %978 = vmatprep.subr.mxu0 0.0
        %979 = vmatpush1.msra.mxu0 0.0
        %980 = vmatprep.subr.mxu0 0.0
        %981 = vmatpush1.msra.mxu0 0.0
        %982 = vmatprep.subr.mxu0 0.0
        %983 = vmatpush1.msra.mxu0 0.0
        %984 = vmatprep.subr.mxu0 0.0
        %985 = vmatpush1.msra.mxu0 0.0
        %986 = vmatprep.subr.mxu0 0.0
        %987 = vmatpush1.msra.mxu0 0.0
        %988 = vmatprep.subr.mxu0 0.0
        %989 = vmatpush1.msra.mxu0 0.0
        %990 = vmatprep.subr.mxu0 0.0
        %991 = vmatpush1.msra.mxu0 0.0
        %992 = vmatprep.subr.mxu0 0.0
        %993 = vmatpush1.msra.mxu0 0.0
        %994 = vmatprep.mubr.f32.mxu0 0.0
        %995 = vmatmul.mubr.f32.gmra.mrb[0].mxu0 %v709
        %v996 = vpop.f32.mrb[0].mxu0
        %v997 = vadd.f32 0.0, %v996
        %v998 = vpop.f32.mrb[0].mxu0
        %v999 = vadd.f32 0.0, %v998
        %1000 = vmatprep.mubr.f32.mxu0 0.0
        %1001 = vmatmul.mubr.f32.gmra.mrb[0].mxu0 %v712
        %v1002 = vpop.f32.mrb[0].mxu0
        %v1003 = vadd.f32 0.0, %v1002
        %v1004 = vpop.f32.mrb[0].mxu0
        %v1005 = vadd.f32 0.0, %v1004
        %1006 = vmatprep.mubr.f32.mxu0 0.0
        %1007 = vmatmul.mubr.f32.gmra.mrb[0].mxu0 %v715
        %v1008 = vpop.f32.mrb[0].mxu0
        %v1009 = vadd.f32 0.0, %v1008
        %v1010 = vpop.f32.mrb[0].mxu0
        %v1011 = vadd.f32 0.0, %v1010
        %1012 = vmatprep.mubr.f32.mxu0 0.0
        %1013 = vmatmul.mubr.f32.gmra.mrb[0].mxu0 %v718
        %v1014 = vpop.f32.mrb[0].mxu0
        %v1015 = vadd.f32 0.0, %v1014
        %v1016 = vpop.f32.mrb[0].mxu0
        %v1017 = vadd.f32 0.0, %v1016
        %1018 = vdwg.mxu0
        %v1019 = vadd.f32 %v674, %v997
        %v1020 = vadd.f32 %v676, %v999
        %v1021 = vadd.f32 %v680, %v1003
        %v1022 = vadd.f32 %v682, %v1005
        %v1023 = vadd.f32 %v686, %v1009
        %v1024 = vadd.f32 %v688, %v1011
        %v1025 = vadd.f32 %v692, %v1015
        %v1026 = vadd.f32 %v694, %v1017
        %v1027 = vtanh.pop %v1019
        %v1028 = vtanh.pop %v1020
        %v1029 = vtanh.pop %v1021
        %v1030 = vtanh.pop %v1022
        %v1031 = vtanh.pop %v1023
        %v1032 = vtanh.pop %v1024
        %v1033 = vtanh.pop %v1025
        %v1034 = vtanh.pop %v1026
        %v1035 = vld [vmem:[%s7] sm:$0xff]
        %v1036 = vld [vmem:[%s8] sm:$0xff]
        %1038 = vset.pattern.permute.xlu0 0
        %1039 = vperm.xlu0 %1038, %v1036
        %v1040 = vpop.permute.xlu0 %1039
        %v1043 = vsel %vm594, %v1035, 0
        %1045 = vmatprep.subr.mxu0 %v1028
        %1046 = vmatpush1.msra.mxu0 %v1027
        %1047 = vmatprep.subr.mxu0 %v1030
        %1048 = vmatpush1.msra.mxu0 %v1029
        %1049 = vmatprep.subr.mxu0 %v1032
        %1050 = vmatpush1.msra.mxu0 %v1031
        %1051 = vmatprep.subr.mxu0 %v1034
        %1052 = vmatpush1.msra.mxu0 %v1033
        %1053 = vmatprep.subr.mxu0 0.0
        %1054 = vmatpush1.msra.mxu0 0.0
        %1055 = vmatprep.subr.mxu0 0.0
        %1056 = vmatpush1.msra.mxu0 0.0
        %1057 = vmatprep.subr.mxu0 0.0
        %1058 = vmatpush1.msra.mxu0 0.0
        %1059 = vmatprep.subr.mxu0 0.0
        %1060 = vmatpush1.msra.mxu0 0.0
        %1061 = vmatprep.subr.mxu0 0.0
        %1062 = vmatpush1.msra.mxu0 0.0
        %1063 = vmatprep.subr.mxu0 0.0
        %1064 = vmatpush1.msra.mxu0 0.0
        %1065 = vmatprep.subr.mxu0 0.0
        %1066 = vmatpush1.msra.mxu0 0.0
        %1067 = vmatprep.subr.mxu0 0.0
        %1068 = vmatpush1.msra.mxu0 0.0
        %1069 = vmatprep.subr.mxu0 0.0
        %1070 = vmatpush1.msra.mxu0 0.0
        %1071 = vmatprep.subr.mxu0 0.0
        %1072 = vmatpush1.msra.mxu0 0.0
        %1073 = vmatprep.subr.mxu0 0.0
        %1074 = vmatpush1.msra.mxu0 0.0
        %1075 = vmatprep.subr.mxu0 0.0
        %1076 = vmatpush1.msra.mxu0 0.0
        %1077 = vmatprep.subr.mxu0 0.0
        %1078 = vmatpush1.msra.mxu0 0.0
        %1079 = vmatprep.subr.mxu0 0.0
        %1080 = vmatpush1.msra.mxu0 0.0
        %1081 = vmatprep.subr.mxu0 0.0
        %1082 = vmatpush1.msra.mxu0 0.0
        %1083 = vmatprep.subr.mxu0 0.0
        %1084 = vmatpush1.msra.mxu0 0.0
        %1085 = vmatprep.subr.mxu0 0.0
        %1086 = vmatpush1.msra.mxu0 0.0
        %1087 = vmatprep.subr.mxu0 0.0
        %1088 = vmatpush1.msra.mxu0 0.0
        %1089 = vmatprep.subr.mxu0 0.0
        %1090 = vmatpush1.msra.mxu0 0.0
        %1091 = vmatprep.subr.mxu0 0.0
        %1092 = vmatpush1.msra.mxu0 0.0
        %1093 = vmatprep.subr.mxu0 0.0
        %1094 = vmatpush1.msra.mxu0 0.0
        %1095 = vmatprep.subr.mxu0 0.0
        %1096 = vmatpush1.msra.mxu0 0.0
        %1097 = vmatprep.subr.mxu0 0.0
        %1098 = vmatpush1.msra.mxu0 0.0
        %1099 = vmatprep.subr.mxu0 0.0
        %1100 = vmatpush1.msra.mxu0 0.0
        %1101 = vmatprep.subr.mxu0 0.0
        %1102 = vmatpush1.msra.mxu0 0.0
        %1103 = vmatprep.subr.mxu0 0.0
        %1104 = vmatpush1.msra.mxu0 0.0
        %1105 = vmatprep.subr.mxu0 0.0
        %1106 = vmatpush1.msra.mxu0 0.0
        %1107 = vmatprep.subr.mxu0 0.0
        %1108 = vmatpush1.msra.mxu0 0.0
        %1109 = vmatprep.mubr.f32.mxu0 0.0
        %1110 = vmatmul.mubr.f32.gmra.mrb[0].mxu0 %v1043
        %v1111 = vpop.f32.mrb[0].mxu0
        %v1112 = vadd.f32 %v1040, %v1111
        %v1113 = vpop.f32.mrb[0].mxu0
        %v1114 = vadd.f32 %v1040, %v1113
        %1115 = vdwg.mxu0
        %v1116 = vadd.f32 %v1112, %v426
        %v1117 = vadd.f32 %v1114, %v427
        %v1118 = vmax.f32 %v1116, 0.0
        %v1119 = vmax.f32 %v1117, 0.0
        %1120 = vst [vmem:[%s423] sm:$0xff] %v1118
        %1121 = vst [vmem:[%s423 + $0x8] sm:$0xff] %v1119
        %1122 = vst [vmem:[%s411] sm:$0xff] %v1027
        %1123 = vst [vmem:[%s411 + $0x8] sm:$0xff] %v1028
        %1124 = vst [vmem:[%s411 + $0x10] sm:$0xff] %v1029
        %1125 = vst [vmem:[%s411 + $0x18] sm:$0xff] %v1030
        %1126 = vst [vmem:[%s411 + $0x20] sm:$0xff] %v1031
        %1127 = vst [vmem:[%s411 + $0x28] sm:$0xff] %v1032
        %1128 = vst [vmem:[%s411 + $0x30] sm:$0xff] %v1033
        %1129 = vst [vmem:[%s411 + $0x38] sm:$0xff] %v1034
        %s1130 = smul.u32 2, %s22
        %p1131 = scmp.lt.s32.totalorder %s1130, 3
        %s1132 = scalar_select %p1131, %s1130, 3
        %s1133 = smul.addr %s1132, 8
        %s1134 = scalar_lea.vmem %s9, %s1133
        %s1135 = sand.u32 %s255, 1
        %s1136 = sand.u32 %s255, 1
        %s1137 = smul.addr %s1136, 64
        %s1138 = scalar_lea.vmem [#allocation3], %s1137
        // Predicated region
        $region80: #{_forward_impl.1} parent=74 // pred_check
          %p1139 = pneg %p239
        $region81: #{_forward_impl.1} parent=74 // pred_check_branch
          %1141 = sbr.rel (%p1139) target = $region83
        $region82: #{_forward_impl.1} parent=74 // pred_region
          %s1142 = smul.u32 2, %s22
        $region83: #{_forward_impl.1} parent=74 // pred_fallthru
          _
        // Predicated region
        $region84: #{_forward_impl.1} parent=74 // pred_check
          %p1143 = pneg %p265
        $region85: #{_forward_impl.1} parent=74 // pred_check_branch
          %1145 = sbr.rel (%p1143) target = $region87
        $region86: #{_forward_impl.1} parent=74 // pred_region
          %s1146 = smul.u32 2, %s22
          %s1147 = smul.addr %s1146, 8
          %s1148 = scalar_lea.vmem %s10, %s1147
          // Predicated region
          $region88: #{_forward_impl.1} parent=86 // pred_check
            _
          $region89: #{_forward_impl.1} parent=86 // pred_check_branch
            %1150 = sbr.rel (0) target = $region91
          $region90: #{_forward_impl.1} parent=86 // pred_region
            // Predicated region
            $region92: #{_forward_impl.1} parent=90 // pred_check
              _
            $region93: #{_forward_impl.1} parent=90 // pred_check_branch
              %1152 = sbr.rel (0) target = $region95
            $region94: #{_forward_impl.1} parent=90 // pred_region
              loop: start=0, step=1, limit=1
              $region96: #{_forward_impl.1} parent=94 // loop_pre_header
                _
              $region97: #{_forward_impl.1} parent=94 // loop_header
                %s1154 = sphi 0, %s1158
                %p1155 = scmp.ge.s32.totalorder %s1154, 1
                %s1159 = sphi %s1138, %s1138
                %s1160 = sphi %s1148, %s1148
              $region98: #{_forward_impl.1} parent=94 // loop_header_branch
                %1157 = sbr.rel (%p1155) target = $region102
              $region99: #{_forward_impl.1} parent=94 // loop_body
                %v1161 = vld [vmem:[%s1159] sm:$0xff]
                %1162 = vst [vmem:[%s1160] sm:$0xff] %v1161
                %v1163 = vld [vmem:[%s1159 + $0x8] sm:$0xff]
                %1164 = vst [vmem:[%s1160 + $0x8] sm:$0xff] %v1163
                %v1165 = vld [vmem:[%s1159 + $0x10] sm:$0xff]
                %1166 = vst [vmem:[%s1160 + $0x20] sm:$0xff] %v1165
                %v1167 = vld [vmem:[%s1159 + $0x18] sm:$0xff]
                %1168 = vst [vmem:[%s1160 + $0x28] sm:$0xff] %v1167
                %v1169 = vld [vmem:[%s1159 + $0x20] sm:$0xff]
                %1170 = vst [vmem:[%s1160 + $0x40] sm:$0xff] %v1169
                %v1171 = vld [vmem:[%s1159 + $0x28] sm:$0xff]
                %1172 = vst [vmem:[%s1160 + $0x48] sm:$0xff] %v1171
                %v1173 = vld [vmem:[%s1159 + $0x30] sm:$0xff]
                %1174 = vst [vmem:[%s1160 + $0x60] sm:$0xff] %v1173
                %v1175 = vld [vmem:[%s1159 + $0x38] sm:$0xff]
                %1176 = vst [vmem:[%s1160 + $0x68] sm:$0xff] %v1175
              $region100: #{_forward_impl.1} parent=94 // loop_footer
                %s1158 = sadd.s32 1, %s1154
              $region101: #{_forward_impl.1} parent=94 // loop_footer_branch
                %1153 = sbr.rel target = $region97
              $region102: #{_forward_impl.1} parent=94 // loop_exit
                _
            $region95: #{_forward_impl.1} parent=90 // pred_fallthru
              _
            // Predicated region
            $region103: #{_forward_impl.1} parent=90 // pred_check
              _
            $region104: #{_forward_impl.1} parent=90 // pred_check_branch
              %1178 = sbr.rel target = $region106
            $region105: #{_forward_impl.1} parent=90 // pred_region
              _
            $region106: #{_forward_impl.1} parent=90 // pred_fallthru
              _
          $region91: #{_forward_impl.1} parent=86 // pred_fallthru
            _
          %1179 = vnop
        $region87: #{_forward_impl.1} parent=74 // pred_fallthru
          _
      $region75: #{_forward_impl.1} parent=5 // pred_fallthru
        _
      %p1180 = scmp.le.s32.totalorder 2, %s17
      // Predicated region
      $region107: #{_forward_impl.1} parent=5 // pred_check
        %p1181 = pneg %p1180
      $region108: #{_forward_impl.1} parent=5 // pred_check_branch
        %1183 = sbr.rel (%p1181) target = $region110
      $region109: #{_forward_impl.1} parent=5 // pred_region
        %s1184 = ssub.s32 %s17, 2
        // Predicated region
        $region111: #{_forward_impl.1} parent=109 // pred_check
          %p1185 = pneg %p245
        $region112: #{_forward_impl.1} parent=109 // pred_check_branch
          %1187 = sbr.rel (%p1185) target = $region114
        $region113: #{_forward_impl.1} parent=109 // pred_region
          %s1188 = smul.u32 2, %s23
          %p1189 = scmp.lt.s32.totalorder %s1188, 3
          %s1190 = scalar_select %p1189, %s1188, 3
          %s1191 = smul.addr %s1190, 8
          %s1192 = scalar_lea.vmem %s9, %s1191
        $region114: #{_forward_impl.1} parent=109 // pred_fallthru
          _
        // Predicated region
        $region115: #{_forward_impl.1} parent=109 // pred_check
          %p1193 = pneg %p271
        $region116: #{_forward_impl.1} parent=109 // pred_check_branch
          %1195 = sbr.rel (%p1193) target = $region118
        $region117: #{_forward_impl.1} parent=109 // pred_region
          %s1196 = sand.u32 %s256, 1
          %s1197 = sand.u32 %s256, 1
          %s1198 = smul.addr %s1197, 64
          %s1199 = scalar_lea.vmem [#allocation3], %s1198
        $region118: #{_forward_impl.1} parent=109 // pred_fallthru
          _
      $region110: #{_forward_impl.1} parent=5 // pred_fallthru
        _
    $region6: #{_forward_impl.1} parent=1 // loop_footer
      %s21 = sadd.s32 1, %s17
    $region7: #{_forward_impl.1} parent=1 // loop_footer_branch
      %16 = sbr.rel target = $region3
    $region8: #{_forward_impl.1} parent=1 // loop_exit
      _

</llo_original>
